<compile_context>
chip_gen: v7x
topology: tpu7x:2x2x1
jax: 0.10.0
libtpu: 0.0.40
codegen_flags: <defaults>
</compile_context>

<pallas_src>
import jax
import jax.numpy as jnp
from jax.experimental import pallas as pl
from jax.experimental.pallas import tpu as pltpu


# ----------------------------------------------------------------------------
# Fused single-pass kernel (whole (C, HW) slab per batch row fits VMEM)
# ----------------------------------------------------------------------------
def channel_gate_kernel(x_ref, w1t_ref, b1_ref, w2t_ref, b2_ref,
                        out_ref, att_ref):
    # x_ref: (Bt, C, HW) block, NATIVE dtype (no whole-block f32 copy).
    xv = x_ref[...]
    hw = xv.shape[-1]

    # --- spatial pooling over HW -> (Bt, C), C on lanes; f32 accumulation ---
    avg = jnp.sum(xv, axis=-1, dtype=jnp.float32) * (1.0 / hw)   # (Bt, C)
    mx = jnp.max(xv, axis=-1).astype(jnp.float32)                # (Bt, C)
    pooled = jnp.concatenate([avg, mx], axis=0)                  # (2*Bt, C)

    # --- shared 2-layer MLP, single dot chain for avg+max branches ---
    h = jnp.dot(pooled, w1t_ref[...], preferred_element_type=jnp.float32)
    h = jnp.maximum(h + b1_ref[...], 0.0)
    att2 = jnp.dot(h, w2t_ref[...], preferred_element_type=jnp.float32)
    att2 = att2 + b2_ref[...]                                    # (2*Bt, C)

    bt = avg.shape[0]
    att = att2[:bt] + att2[bt:]                                  # (Bt, C)

    # --- gate and rescale, in the native dtype (cast scale down once) ---
    scale3 = jax.nn.sigmoid(att).astype(out_ref.dtype)[:, :, None]  # (Bt, C, 1)
    out_ref[...] = xv * scale3
    att_ref[0] = att


# ----------------------------------------------------------------------------
# HW-split fallback kernels (single (C, HW) slab does not fit VMEM budget)
# ----------------------------------------------------------------------------
def _pool_kernel(x_ref, sum_ref, max_ref):
    hw_step = pl.program_id(1)
    xv = x_ref[...]                                              # (1, C, HWt)
    tile_sum = jnp.sum(xv, axis=-1, keepdims=True, dtype=jnp.float32)  # (1, C, 1)
    tile_max = jnp.max(xv, axis=-1, keepdims=True).astype(jnp.float32)

    @pl.when(hw_step == 0)
    def _():
        sum_ref[...] = tile_sum
        max_ref[...] = tile_max

    @pl.when(hw_step != 0)
    def _():
        sum_ref[...] = sum_ref[...] + tile_sum
        max_ref[...] = jnp.maximum(max_ref[...], tile_max)


def _scale_kernel(x_ref, scale_ref, out_ref):
    s = scale_ref[...].astype(out_ref.dtype)                     # (1, C, 1)
    out_ref[...] = x_ref[...] * s


# ----------------------------------------------------------------------------
# VMEM budgeting / tiling heuristics
# ----------------------------------------------------------------------------
def _vmem_budget_and_limit():
    """Generation-aware VMEM budget for double-buffered blocks + scoped limit."""
    try:
        info = pltpu.get_tpu_info()
        cap = getattr(info, "vmem_capacity_bytes", None)
    except Exception:
        cap = None
    if not cap:
        cap = 64 << 20  # conservative: v7x per-TC VMEM
    # ~42 MiB budget on 128 MiB chips (v5e/v6e), ~21 MiB on v7x (64 MiB).
    budget = min(cap // 3, 48 << 20)
    limit = min(cap, budget + (16 << 20))
    return budget, limit


def _pick_batch_tile(B, C, HW, itemsize, budget):
    """Batch rows per block. Returns None if one (C, HW) slab cannot fit."""
    per_batch = max(1, 4 * C * HW * itemsize)   # 2 (dbl-buf) * (in + out) per row
    max_bt = budget // per_batch
    if max_bt < 1:
        return None
    bt = min(B, max_bt)
    nsteps = -(-B // bt)
    slab = C * HW * itemsize
    min_block = 2 << 20   # keep per-step blocks >= 2 MiB (avoid step-overhead regime)

    # Prefer >= 2 grid steps (keeps both v7x TensorCores busy) if blocks stay big.
    if nsteps == 1 and B > 1:
        bt2 = -(-B // 2)
        if bt2 * slab >= min_block:
            bt = bt2
            nsteps = -(-B // bt)

    # Prefer an EVEN number of steps (2-TC balance) if blocks stay big enough.
    if nsteps > 1 and nsteps % 2 == 1:
        bt2 = -(-B // (nsteps + 1))
        if bt2 >= 1 and bt2 * slab >= min_block:
            bt = bt2
    return bt


def _pick_hw_tile(C, HW, itemsize, budget):
    """HW tile for the fallback path: multiple of 128 that divides HW."""
    per_hw = max(1, 4 * C * itemsize)
    max_hwt = max(128, (budget // per_hw) // 128 * 128)
    cands = [t for t in range(128, HW + 1, 128) if HW % t == 0 and t <= max_hwt]
    if cands:
        return cands[-1]
    # TODO(synk): pad HW to a multiple of 128 for awkward spatial sizes.
    return HW


# ----------------------------------------------------------------------------
# Fallback path: HW-tiled pooling + tiny JAX MLP + HW-tiled rescale
# ----------------------------------------------------------------------------
def _channel_gate_hw_split(x_flat, w1, b1, w2, b2, budget, vmem_limit):
    B, C, HW = x_flat.shape
    itemsize = jnp.dtype(x_flat.dtype).itemsize
    hwt = _pick_hw_tile(C, HW, itemsize, budget)
    nhw = HW // hwt if HW % hwt == 0 else 1
    if nhw == 1:
        hwt = HW

    sum_pool, max_pool = pl.pallas_call(
        _pool_kernel,
        out_shape=(jax.ShapeDtypeStruct((B, C, 1), jnp.float32),
                   jax.ShapeDtypeStruct((B, C, 1), jnp.float32)),
        grid_spec=pltpu.PrefetchScalarGridSpec(
            num_scalar_prefetch=0,
            grid=(B, nhw),
            in_specs=[pl.BlockSpec((1, C, hwt), lambda b, h: (b, 0, h))],
            out_specs=[pl.BlockSpec((1, C, 1), lambda b, h: (b, 0, 0)),
                       pl.BlockSpec((1, C, 1), lambda b, h: (b, 0, 0))],
        ),
        compiler_params=pltpu.CompilerParams(
            dimension_semantics=("parallel", "arbitrary"),
            vmem_limit_bytes=vmem_limit),
    )(x_flat)

    avg_pool = sum_pool[:, :, 0] * (1.0 / HW)        # (B, C) f32
    max_pool = max_pool[:, :, 0]                     # (B, C) f32

    w1f, b1f = w1.astype(jnp.float32), b1.astype(jnp.float32)
    w2f, b2f = w2.astype(jnp.float32), b2.astype(jnp.float32)

    def mlp(p):
        h = jnp.maximum(p @ w1f.T + b1f, 0.0)
        return h @ w2f.T + b2f

    att = mlp(avg_pool) + mlp(max_pool)              # (B, C)
    scale3 = jax.nn.sigmoid(att)[:, :, None]         # (B, C, 1)

    out_flat = pl.pallas_call(
        _scale_kernel,
        out_shape=jax.ShapeDtypeStruct((B, C, HW), x_flat.dtype),
        grid_spec=pltpu.PrefetchScalarGridSpec(
            num_scalar_prefetch=0,
            grid=(B, nhw),
            in_specs=[pl.BlockSpec((1, C, hwt), lambda b, h: (b, 0, h)),
                      pl.BlockSpec((1, C, 1), lambda b, h: (b, 0, 0))],
            out_specs=pl.BlockSpec((1, C, hwt), lambda b, h: (b, 0, h)),
        ),
        compiler_params=pltpu.CompilerParams(
            dimension_semantics=("parallel", "parallel"),
            vmem_limit_bytes=vmem_limit),
    )(x_flat, scale3)

    return out_flat, jnp.mean(jnp.abs(att))


# ----------------------------------------------------------------------------
# Public wrapper
# ----------------------------------------------------------------------------
def channel_gate_forward(x, w1, b1, w2, b2, *, vmem_budget_bytes=None):
    """x: (B, C, H, W).  w1: (hidden, C), b1: (hidden,), w2: (C, hidden),
    b2: (C,) — PyTorch nn.Linear conventions (y = x @ W.T + b).
    Returns (x * sigmoid(att), mean(|att|))."""
    B, C, H, W = x.shape
    HW = H * W
    hidden = w1.shape[0]

    auto_budget, vmem_limit = _vmem_budget_and_limit()
    budget = auto_budget if vmem_budget_bytes is None else vmem_budget_bytes

    x_flat = x.reshape(B, C, HW)                      # keep native dtype
    itemsize = jnp.dtype(x.dtype).itemsize

    bt = _pick_batch_tile(B, C, HW, itemsize, budget)
    if bt is None:
        # Single (C, HW) slab does not fit the VMEM budget -> HW-split path.
        out_flat, l1 = _channel_gate_hw_split(x_flat, w1, b1, w2, b2,
                                              budget, vmem_limit)
        return out_flat.reshape(B, C, H, W), l1

    nblocks = -(-B // bt)
    B_pad = nblocks * bt
    if B_pad != B:
        x_flat = jnp.pad(x_flat, ((0, B_pad - B), (0, 0), (0, 0)))

    w1t = jnp.transpose(w1).astype(jnp.float32)       # (C, hidden), tiny
    b1r = b1.reshape(1, hidden).astype(jnp.float32)
    w2t = jnp.transpose(w2).astype(jnp.float32)       # (hidden, C), tiny
    b2r = b2.reshape(1, C).astype(jnp.float32)

    xbytes = B * C * HW * itemsize
    cost = pl.CostEstimate(
        flops=3 * B * C * HW + 8 * B * C * hidden,    # pool + rescale + MLP
        transcendentals=B * C,                        # sigmoid
        bytes_accessed=2 * xbytes + B * C * 4 + 8 * C * hidden,
    )

    out_flat, att = pl.pallas_call(
        channel_gate_kernel,
        out_shape=(
            jax.ShapeDtypeStruct((B_pad, C, HW), x.dtype),
            jax.ShapeDtypeStruct((nblocks, bt, C), jnp.float32),
        ),
        grid_spec=pltpu.PrefetchScalarGridSpec(
            num_scalar_prefetch=0,
            grid=(nblocks,),
            in_specs=[
                pl.BlockSpec((bt, C, HW), lambda b: (b, 0, 0)),
                pl.BlockSpec((C, hidden), lambda b: (0, 0)),
                pl.BlockSpec((1, hidden), lambda b: (0, 0)),
                pl.BlockSpec((hidden, C), lambda b: (0, 0)),
                pl.BlockSpec((1, C), lambda b: (0, 0)),
            ],
            out_specs=[
                pl.BlockSpec((bt, C, HW), lambda b: (b, 0, 0)),
                pl.BlockSpec((1, bt, C), lambda b: (b, 0, 0)),
            ],
        ),
        compiler_params=pltpu.CompilerParams(
            dimension_semantics=("parallel",),
            vmem_limit_bytes=vmem_limit),
        cost_estimate=cost,
    )(x_flat, w1t, b1r, w2t, b2r)

    gated = out_flat[:B].reshape(B, C, H, W)
    att_real = att.reshape(B_pad, C)[:B]              # drop padded rows
    l1 = jnp.mean(jnp.abs(att_real))
    return gated, l1


# ----------------------------------------------------------------------------
# Pure-JAX reference (mirrors the PyTorch forward, pool_types=['avg','max'])
# ----------------------------------------------------------------------------
def channel_gate_reference(x, w1, b1, w2, b2):
    def mlp(p):  # p: (B, C)
        h = jnp.maximum(p @ w1.T + b1, 0.0)
        return h @ w2.T + b2

    avg_pool = jnp.mean(x, axis=(2, 3))
    max_pool = jnp.max(x, axis=(2, 3))
    att = mlp(avg_pool) + mlp(max_pool)               # (B, C)
    scale = jax.nn.sigmoid(att)[:, :, None, None]
    return x * scale, jnp.mean(jnp.abs(att))


if __name__ == "__main__":
    # ChannelGate(gate_channels=32, reduction_ratio=16, pool_types=['avg','max'])
    B, C, H, W = 2, 32, 16, 16
    reduction_ratio = 16
    hidden = C // reduction_ratio

    key = jax.random.PRNGKey(0)
    kx, k1, k2, k3, k4, kx3 = jax.random.split(key, 6)

    x = jax.random.normal(kx, (B, C, H, W), dtype=jnp.float32)

    # Deterministic Linear params (PyTorch-style bounds: U(-1/sqrt(fan_in), +))
    bound1 = 1.0 / jnp.sqrt(C)
    w1 = jax.random.uniform(k1, (hidden, C), jnp.float32, -bound1, bound1)
    b1 = jax.random.uniform(k2, (hidden,), jnp.float32, -bound1, bound1)
    bound2 = 1.0 / jnp.sqrt(hidden)
    w2 = jax.random.uniform(k3, (C, hidden), jnp.float32, -bound2, bound2)
    b2 = jax.random.uniform(k4, (C,), jnp.float32, -bound2, bound2)

    ref_out, ref_l1 = channel_gate_reference(x, w1, b1, w2, b2)

    # 1) Fused single-pass path (auto, generation-aware VMEM budget).
    out, l1 = channel_gate_forward(x, w1, b1, w2, b2)
    out = jax.block_until_ready(out)
    l1 = jax.block_until_ready(l1)
    assert jnp.allclose(out, ref_out, atol=1e-5, rtol=1e-5), "output mismatch (fused)"
    assert jnp.allclose(l1, ref_l1, atol=1e-6, rtol=1e-5), "l1 mismatch (fused)"

    # 2) Force the HW-split fallback (budget smaller than one (C, HW) slab).
    out2, l12 = channel_gate_forward(x, w1, b1, w2, b2, vmem_budget_bytes=64 * 1024)
    out2 = jax.block_until_ready(out2)
    l12 = jax.block_until_ready(l12)
    assert jnp.allclose(out2, ref_out, atol=1e-5, rtol=1e-5), "output mismatch (hw-split)"
    assert jnp.allclose(l12, ref_l1, atol=1e-6, rtol=1e-5), "l1 mismatch (hw-split)"

    # 3) Non-divisor batch (B=3) with a mid-size budget -> padded last block.
    x3 = jax.random.normal(kx3, (3, C, H, W), dtype=jnp.float32)
    ref_out3, ref_l13 = channel_gate_reference(x3, w1, b1, w2, b2)
    out3, l13 = channel_gate_forward(x3, w1, b1, w2, b2, vmem_budget_bytes=256 * 1024)
    out3 = jax.block_until_ready(out3)
    l13 = jax.block_until_ready(l13)
    assert jnp.allclose(out3, ref_out3, atol=1e-5, rtol=1e-5), "output mismatch (padded B)"
    assert jnp.allclose(l13, ref_l13, atol=1e-6, rtol=1e-5), "l1 mismatch (padded B)"

    print("KERNEL_OK")
</pallas_src>

<mosaic_0001>
module attributes {stable_mosaic.version = 11 : i64} {
  func.func @channel_gate_kernel(%arg0: i32, %arg1: memref<2x32x256xf32, #tpu.memory_space<vmem>>, %arg2: memref<32x2xf32, #tpu.memory_space<vmem>>, %arg3: memref<1x2xf32, #tpu.memory_space<vmem>>, %arg4: memref<2x32xf32, #tpu.memory_space<vmem>>, %arg5: memref<1x32xf32, #tpu.memory_space<vmem>>, %arg6: memref<2x32x256xf32, #tpu.memory_space<vmem>>, %arg7: memref<1x2x32xf32, #tpu.memory_space<vmem>>) attributes {dimension_semantics = [#tpu.dimension_semantics<parallel>], iteration_bounds = array<i64: 1>, scalar_prefetch = 0 : i64, scratch_operands = 0 : i64, tpu.core_type = #tpu.core_type<tc>, window_params = [{transform_indices = @transform_0, window_bounds = array<i64: 2, 32, 256>}, {pipeline_mode = #tpu.pipeline_mode<synchronous>, transform_indices = @transform_1, window_bounds = array<i64: 32, 2>}, {pipeline_mode = #tpu.pipeline_mode<synchronous>, transform_indices = @transform_2, window_bounds = array<i64: 1, 2>}, {pipeline_mode = #tpu.pipeline_mode<synchronous>, transform_indices = @transform_3, window_bounds = array<i64: 2, 32>}, {pipeline_mode = #tpu.pipeline_mode<synchronous>, transform_indices = @transform_4, window_bounds = array<i64: 1, 32>}, {transform_indices = @transform_5, window_bounds = array<i64: 2, 32, 256>}, {transform_indices = @transform_6, window_bounds = array<i64: 1, 2, 32>}]} {
    %c0 = arith.constant 0 : index
    %c0_0 = arith.constant 0 : index
    %c0_1 = arith.constant 0 : index
    %0 = vector.load %arg1[%c0, %c0_0, %c0_1] : memref<2x32x256xf32, #tpu.memory_space<vmem>>, vector<2x32x256xf32>
    %cst = arith.constant dense<0.000000e+00> : vector<2x32xf32>
    %1 = vector.multi_reduction <add>, %0, %cst [2] : vector<2x32x256xf32> to vector<2x32xf32>
    %cst_2 = arith.constant 3.906250e-03 : f32
    %2 = vector.broadcast %cst_2 : f32 to vector<2x32xf32>
    %3 = arith.mulf %1, %2 : vector<2x32xf32>
    %cst_3 = arith.constant dense<0xFF800000> : vector<2x32xf32>
    %4 = vector.multi_reduction <maximumf>, %0, %cst_3 [2] : vector<2x32x256xf32> to vector<2x32xf32>
    %5 = tpu.concatenate %3, %4 in 0 : vector<2x32xf32>, vector<2x32xf32> -> vector<4x32xf32>
    %c0_4 = arith.constant 0 : index
    %c0_5 = arith.constant 0 : index
    %6 = vector.load %arg2[%c0_4, %c0_5] : memref<32x2xf32, #tpu.memory_space<vmem>>, vector<32x2xf32>
    %cst_6 = arith.constant dense<0.000000e+00> : vector<4x2xf32>
    %7 = tpu.matmul %5, %6, %cst_6 {dimension_numbers = #tpu.dot_dimension_numbers<[1], [0], [0], [1], [0, 0, 1, 1], [], []>} : vector<4x32xf32>, vector<32x2xf32>, vector<4x2xf32> -> vector<4x2xf32>
    %c0_7 = arith.constant 0 : index
    %c0_8 = arith.constant 0 : index
    %8 = vector.load %arg3[%c0_7, %c0_8] : memref<1x2xf32, #tpu.memory_space<vmem>>, vector<1x2xf32>
    %9 = vector.broadcast %8 : vector<1x2xf32> to vector<4x2xf32>
    %10 = arith.addf %7, %9 : vector<4x2xf32>
    %cst_9 = arith.constant 0.000000e+00 : f32
    %11 = vector.broadcast %cst_9 : f32 to vector<4x2xf32>
    %12 = arith.maximumf %10, %11 : vector<4x2xf32>
    %c0_10 = arith.constant 0 : index
    %c0_11 = arith.constant 0 : index
    %13 = vector.load %arg4[%c0_10, %c0_11] : memref<2x32xf32, #tpu.memory_space<vmem>>, vector<2x32xf32>
    %cst_12 = arith.constant dense<0.000000e+00> : vector<4x32xf32>
    %14 = tpu.matmul %12, %13, %cst_12 {dimension_numbers = #tpu.dot_dimension_numbers<[1], [0], [0], [1], [0, 0, 1, 1], [], []>} : vector<4x2xf32>, vector<2x32xf32>, vector<4x32xf32> -> vector<4x32xf32>
    %c0_13 = arith.constant 0 : index
    %c0_14 = arith.constant 0 : index
    %15 = vector.load %arg5[%c0_13, %c0_14] : memref<1x32xf32, #tpu.memory_space<vmem>>, vector<1x32xf32>
    %16 = vector.broadcast %15 : vector<1x32xf32> to vector<4x32xf32>
    %17 = arith.addf %14, %16 : vector<4x32xf32>
    %18 = vector.extract_strided_slice %17 {offsets = [0, 0], sizes = [2, 32], strides = [1, 1]} : vector<4x32xf32> to vector<2x32xf32>
    %19 = vector.extract_strided_slice %17 {offsets = [2, 0], sizes = [2, 32], strides = [1, 1]} : vector<4x32xf32> to vector<2x32xf32>
    %20 = arith.addf %18, %19 : vector<2x32xf32>
    %21 = arith.negf %20 : vector<2x32xf32>
    %22 = math.exp %21 : vector<2x32xf32>
    %cst_15 = arith.constant 1.000000e+00 : f32
    %23 = vector.broadcast %cst_15 : f32 to vector<2x32xf32>
    %24 = arith.addf %23, %22 : vector<2x32xf32>
    %25 = arith.divf %23, %24 : vector<2x32xf32>
    %26 = vector.shape_cast %25 : vector<2x32xf32> to vector<2x32x1xf32>
    %27 = vector.broadcast %26 : vector<2x32x1xf32> to vector<2x32x256xf32>
    %28 = arith.mulf %0, %27 : vector<2x32x256xf32>
    %c0_16 = arith.constant 0 : index
    %c0_17 = arith.constant 0 : index
    %c0_18 = arith.constant 0 : index
    %29 = vector.load %arg6[%c0_16, %c0_17, %c0_18] : memref<2x32x256xf32, #tpu.memory_space<vmem>>, vector<2x32x256xf32>
    tpu.vector_store %arg6[%c0_16, %c0_17, %c0_18], %28 {strides = array<i32>} : memref<2x32x256xf32, #tpu.memory_space<vmem>>, vector<2x32x256xf32>,
    %c0_19 = arith.constant 0 : index
    %c0_20 = arith.constant 0 : index
    %c0_21 = arith.constant 0 : index
    %30 = vector.load %arg7[%c0_19, %c0_20, %c0_21] : memref<1x2x32xf32, #tpu.memory_space<vmem>>, vector<1x2x32xf32>
    %31 = vector.shape_cast %30 : vector<1x2x32xf32> to vector<2x32xf32>
    %32 = vector.shape_cast %20 : vector<2x32xf32> to vector<1x2x32xf32>
    tpu.vector_store %arg7[%c0_19, %c0_20, %c0_21], %32 {strides = array<i32>} : memref<1x2x32xf32, #tpu.memory_space<vmem>>, vector<1x2x32xf32>,
    return
  }
  func.func @transform_0(%arg0: i32) -> (i32, i32, i32) {
    %c0_i32 = arith.constant 0 : i32
    %c0_i32_0 = arith.constant 0 : i32
    %c0_i32_1 = arith.constant 0 : i32
    return %arg0, %c0_i32, %c0_i32_0 : i32, i32, i32
  }
  func.func @transform_1(%arg0: i32) -> (i32, i32) {
    %c0_i32 = arith.constant 0 : i32
    %c0_i32_0 = arith.constant 0 : i32
    %c0_i32_1 = arith.constant 0 : i32
    return %c0_i32, %c0_i32_0 : i32, i32
  }
  func.func @transform_2(%arg0: i32) -> (i32, i32) {
    %c0_i32 = arith.constant 0 : i32
    %c0_i32_0 = arith.constant 0 : i32
    %c0_i32_1 = arith.constant 0 : i32
    return %c0_i32, %c0_i32_0 : i32, i32
  }
  func.func @transform_3(%arg0: i32) -> (i32, i32) {
    %c0_i32 = arith.constant 0 : i32
    %c0_i32_0 = arith.constant 0 : i32
    %c0_i32_1 = arith.constant 0 : i32
    return %c0_i32, %c0_i32_0 : i32, i32
  }
  func.func @transform_4(%arg0: i32) -> (i32, i32) {
    %c0_i32 = arith.constant 0 : i32
    %c0_i32_0 = arith.constant 0 : i32
    %c0_i32_1 = arith.constant 0 : i32
    return %c0_i32, %c0_i32_0 : i32, i32
  }
  func.func @transform_5(%arg0: i32) -> (i32, i32, i32) {
    %c0_i32 = arith.constant 0 : i32
    %c0_i32_0 = arith.constant 0 : i32
    %c0_i32_1 = arith.constant 0 : i32
    return %arg0, %c0_i32, %c0_i32_0 : i32, i32, i32
  }
  func.func @transform_6(%arg0: i32) -> (i32, i32, i32) {
    %c0_i32 = arith.constant 0 : i32
    %c0_i32_0 = arith.constant 0 : i32
    %c0_i32_1 = arith.constant 0 : i32
    return %arg0, %c0_i32, %c0_i32_0 : i32, i32, i32
  }
}

</mosaic_0001>

<llo_original>
// kernel: tpu_custom_call.1
$region0: #{tpu_custom_call.1}
  #allocation0 [shape = 'u32[]', space=smem, size = 0x4, offset = 0x4, fixed_abs, tag = 'smem constant byte address 0x4 - core index']
  #allocation1 [shape = 'u32[144,128]{1,0:T(1,128)}', space=vmem, size = 0x12000, scoped, tag = 'internal scratch']
  %s0 = inlined_call_operand.hbm [shape: f32[2,32,256], index: 0, kind: input, shape index: {}]
  %s1 = inlined_call_operand.vmem [shape: f32[32,2], index: 1, kind: input, shape index: {}]
  %s2 = inlined_call_operand.vmem [shape: f32[1,2], index: 2, kind: input, shape index: {}]
  %s3 = inlined_call_operand.vmem [shape: f32[2,32], index: 3, kind: input, shape index: {}]
  %s4 = inlined_call_operand.vmem [shape: f32[1,32], index: 4, kind: input, shape index: {}]
  %s5 = inlined_call_operand.hbm [shape: f32[2,32,256], index: 5, kind: output, shape index: {0}]
  %s6 = inlined_call_operand.hbm [shape: f32[1,2,32], index: 6, kind: output, shape index: {1}]
  %7 = xla_tuple %s5, %s6
  %s8 = sld [smem:[#allocation0]]
  $region42: #{tpu_custom_call.1} parent=0
    _
  %s10 = ssub.s32 1, %s8
  %s11 = scalar_select 0, %s10, %s8
  $region1: #{tpu_custom_call.1} parent=0
    #allocation2 [shape = 'u8[65536]{0}', space=vmem, size = 0x10000, scoped, tag = 'input window, operand 0, single buffered']
    #allocation3 [shape = 's32[1]{0}', space=sflag, size = 0x4, scoped, tag = 'scoped memory for tpu_custom_call.1']
    #allocation4 [shape = 's32[1]{0}', space=sflag, size = 0x4, scoped, tag = 'scoped memory for tpu_custom_call.1']
    #allocation5 [shape = 'u8[65536]{0}', space=vmem, size = 0x10000, scoped, tag = 'output window, operand 0, single buffered']
    #allocation6 [shape = 'u8[1024]{0}', space=vmem, size = 0x400, scoped, tag = 'output window, operand 1, single buffered']
    #allocation7 [shape = 's32[1]{0}', space=sflag, size = 0x4, scoped, tag = 'scoped memory for tpu_custom_call.1']
    %12 = vsyncpa [#allocation3], 0
    %13 = vsyncpa [#allocation4], 0
    %14 = vsyncpa [#allocation7], 0
    // Predicated region
    $region2: #{tpu_custom_call.1} parent=1 // pred_check
      _
    $region3: #{tpu_custom_call.1} parent=1 // pred_check_branch
      %16 = sbr.rel (0) target = $region5
    $region4: #{tpu_custom_call.1} parent=1 // pred_region
      %s18 = ssub.s32 2048, 2048
      %19 = vsyncadd [#allocation3], %s18
      %s20 = sshll.u32 [#allocation2], 4
      %s21 = int_to_ptr.vmem [resolvable:$true] %s20
      %26 = dma.hbm_to_vmem [thread:$0]  %s0, 2048, %s21, [#allocation3], 256, 256, 16
    $region5: #{tpu_custom_call.1} parent=1 // pred_fallthru
      _
    // Predicated region
    $region6: #{tpu_custom_call.1} parent=1 // pred_check
      _
    $region7: #{tpu_custom_call.1} parent=1 // pred_check_branch
      %28 = sbr.rel (0) target = $region9
    $region8: #{tpu_custom_call.1} parent=1 // pred_region
      _
    $region9: #{tpu_custom_call.1} parent=1 // pred_fallthru
      _
    // Predicated region
    $region10: #{tpu_custom_call.1} parent=1 // pred_check
      _
    $region11: #{tpu_custom_call.1} parent=1 // pred_check_branch
      %30 = sbr.rel (0) target = $region13
    $region12: #{tpu_custom_call.1} parent=1 // pred_region
      _
    $region13: #{tpu_custom_call.1} parent=1 // pred_fallthru
      _
    // Predicated region
    $region14: #{tpu_custom_call.1} parent=1 // pred_check
      _
    $region15: #{tpu_custom_call.1} parent=1 // pred_check_branch
      %32 = sbr.rel (0) target = $region17
    $region16: #{tpu_custom_call.1} parent=1 // pred_region
      _
    $region17: #{tpu_custom_call.1} parent=1 // pred_fallthru
      _
    // Predicated region
    $region18: #{tpu_custom_call.1} parent=1 // pred_check
      _
    $region19: #{tpu_custom_call.1} parent=1 // pred_check_branch
      %34 = sbr.rel (0) target = $region21
    $region20: #{tpu_custom_call.1} parent=1 // pred_region
      _
    $region21: #{tpu_custom_call.1} parent=1 // pred_fallthru
      _
    // Predicated region
    $region22: #{tpu_custom_call.1} parent=1 // pred_check
      _
    $region23: #{tpu_custom_call.1} parent=1 // pred_check_branch
      %36 = sbr.rel (0) target = $region25
    $region24: #{tpu_custom_call.1} parent=1 // pred_region
      %37 = dma.done [#allocation3], 2048
    $region25: #{tpu_custom_call.1} parent=1 // pred_fallthru
      _
    %v38 = vld [vmem:[#allocation2] sm:$0xff]
    %v39 = vld [vmem:[#allocation2 + $0x8] sm:$0xff]
    %v40 = vld [vmem:[#allocation2 + $0x10] sm:$0xff]
    %v41 = vld [vmem:[#allocation2 + $0x18] sm:$0xff]
    %v42 = vld [vmem:[#allocation2 + $0x20] sm:$0xff]
    %v43 = vld [vmem:[#allocation2 + $0x28] sm:$0xff]
    %v44 = vld [vmem:[#allocation2 + $0x30] sm:$0xff]
    %v45 = vld [vmem:[#allocation2 + $0x38] sm:$0xff]
    %v46 = vld [vmem:[#allocation2 + $0x40] sm:$0xff]
    %v47 = vld [vmem:[#allocation2 + $0x48] sm:$0xff]
    %v48 = vld [vmem:[#allocation2 + $0x50] sm:$0xff]
    %v49 = vld [vmem:[#allocation2 + $0x58] sm:$0xff]
    %v50 = vld [vmem:[#allocation2 + $0x60] sm:$0xff]
    %v51 = vld [vmem:[#allocation2 + $0x68] sm:$0xff]
    %v52 = vld [vmem:[#allocation2 + $0x70] sm:$0xff]
    %v53 = vld [vmem:[#allocation2 + $0x78] sm:$0xff]
    %v54 = vadd.f32 %v38, %v39
    %55 = vadd.xlane.f32.xlu0 %v54
    %v56 = vpop.xlane.xlu0 %55
    %v57 = vadd.f32 %v40, %v41
    %58 = vadd.xlane.f32.xlu0 %v57
    %v59 = vpop.xlane.xlu0 %58
    %v60 = vadd.f32 %v42, %v43
    %61 = vadd.xlane.f32.xlu0 %v60
    %v62 = vpop.xlane.xlu0 %61
    %v63 = vadd.f32 %v44, %v45
    %64 = vadd.xlane.f32.xlu0 %v63
    %v65 = vpop.xlane.xlu0 %64
    %v66 = vadd.f32 %v46, %v47
    %67 = vadd.xlane.f32.xlu0 %v66
    %v68 = vpop.xlane.xlu0 %67
    %v69 = vadd.f32 %v48, %v49
    %70 = vadd.xlane.f32.xlu0 %v69
    %v71 = vpop.xlane.xlu0 %70
    %v72 = vadd.f32 %v50, %v51
    %73 = vadd.xlane.f32.xlu0 %v72
    %v74 = vpop.xlane.xlu0 %73
    %v75 = vadd.f32 %v52, %v53
    %76 = vadd.xlane.f32.xlu0 %v75
    %v77 = vpop.xlane.xlu0 %76
    %v78 = vmul.f32 %v56, 0.00390625
    %v79 = vmul.f32 %v59, 0.00390625
    %v80 = vmul.f32 %v62, 0.00390625
    %v81 = vmul.f32 %v65, 0.00390625
    %v82 = vmul.f32 %v68, 0.00390625
    %v83 = vmul.f32 %v71, 0.00390625
    %v84 = vmul.f32 %v74, 0.00390625
    %v85 = vmul.f32 %v77, 0.00390625
    %v86 = vmax.f32 %v38, %v39
    %87 = vmax.xlane.f32.xlu0 %v86
    %v88 = vpop.xlane.xlu0 %87
    %v89 = vmax.f32 %v40, %v41
    %90 = vmax.xlane.f32.xlu0 %v89
    %v91 = vpop.xlane.xlu0 %90
    %v92 = vmax.f32 %v42, %v43
    %93 = vmax.xlane.f32.xlu0 %v92
    %v94 = vpop.xlane.xlu0 %93
    %v95 = vmax.f32 %v44, %v45
    %96 = vmax.xlane.f32.xlu0 %v95
    %v97 = vpop.xlane.xlu0 %96
    %v98 = vmax.f32 %v46, %v47
    %99 = vmax.xlane.f32.xlu0 %v98
    %v100 = vpop.xlane.xlu0 %99
    %v101 = vmax.f32 %v48, %v49
    %102 = vmax.xlane.f32.xlu0 %v101
    %v103 = vpop.xlane.xlu0 %102
    %v104 = vmax.f32 %v50, %v51
    %105 = vmax.xlane.f32.xlu0 %v104
    %v106 = vpop.xlane.xlu0 %105
    %v107 = vmax.f32 %v52, %v53
    %108 = vmax.xlane.f32.xlu0 %v107
    %v109 = vpop.xlane.xlu0 %108
    %v118 = vlaneseq
    %v119 = vand.u32 %v118, 127
    %v120 = vlaneseq
    %v121 = vshrl.u32 %v120, 7
    %v122 = vsub.s32 %v119, %v121
    %v123 = vrot.slane %v78, %v122
    %v124 = vadd.s32 %v119, 4294967288
    %v125 = vlaneseq
    %v126 = vshrl.u32 %v125, 7
    %v127 = vsub.s32 %v124, %v126
    %v128 = vrot.slane %v79, %v127
    %vm129 = vcmask 130112
    %v130 = vsel %vm129, %v128, %v123
    %v131 = vadd.s32 %v119, 4294967280
    %v132 = vlaneseq
    %v133 = vshrl.u32 %v132, 7
    %v134 = vsub.s32 %v131, %v133
    %v135 = vrot.slane %v80, %v134
    %vm136 = vcmask 195712
    %v137 = vsel %vm136, %v135, %v130
    %v138 = vadd.s32 %v119, 4294967272
    %v139 = vlaneseq
    %v140 = vshrl.u32 %v139, 7
    %v141 = vsub.s32 %v138, %v140
    %v142 = vrot.slane %v81, %v141
    %vm143 = vcmask 261312
    %v144 = vsel %vm143, %v142, %v137
    %v145 = vlaneseq
    %v146 = vshrl.u32 %v145, 7
    %v147 = vsub.s32 %v119, %v146
    %v148 = vrot.slane %v82, %v147
    %v149 = vlaneseq
    %v150 = vshrl.u32 %v149, 7
    %v151 = vsub.s32 %v124, %v150
    %v152 = vrot.slane %v83, %v151
    %v153 = vsel %vm129, %v152, %v148
    %v154 = vlaneseq
    %v155 = vshrl.u32 %v154, 7
    %v156 = vsub.s32 %v131, %v155
    %v157 = vrot.slane %v84, %v156
    %v158 = vsel %vm136, %v157, %v153
    %v159 = vlaneseq
    %v160 = vshrl.u32 %v159, 7
    %v161 = vsub.s32 %v138, %v160
    %v162 = vrot.slane %v85, %v161
    %v163 = vsel %vm143, %v162, %v158
    %vm164 = vcmask 1041409
    %v165 = vsel %vm164, %v163, %v144
    %v175 = vlaneseq
    %v176 = vshrl.u32 %v175, 7
    %v177 = vsub.s32 %v119, %v176
    %v178 = vrot.slane %v88, %v177
    %v179 = vlaneseq
    %v180 = vshrl.u32 %v179, 7
    %v181 = vsub.s32 %v124, %v180
    %v182 = vrot.slane %v91, %v181
    %v183 = vsel %vm129, %v182, %v178
    %v184 = vlaneseq
    %v185 = vshrl.u32 %v184, 7
    %v186 = vsub.s32 %v131, %v185
    %v187 = vrot.slane %v94, %v186
    %v188 = vsel %vm136, %v187, %v183
    %v189 = vlaneseq
    %v190 = vshrl.u32 %v189, 7
    %v191 = vsub.s32 %v138, %v190
    %v192 = vrot.slane %v97, %v191
    %v193 = vsel %vm143, %v192, %v188
    %v194 = vlaneseq
    %v195 = vshrl.u32 %v194, 7
    %v196 = vsub.s32 %v119, %v195
    %v197 = vrot.slane %v100, %v196
    %v198 = vlaneseq
    %v199 = vshrl.u32 %v198, 7
    %v200 = vsub.s32 %v124, %v199
    %v201 = vrot.slane %v103, %v200
    %v202 = vsel %vm129, %v201, %v197
    %v203 = vlaneseq
    %v204 = vshrl.u32 %v203, 7
    %v205 = vsub.s32 %v131, %v204
    %v206 = vrot.slane %v106, %v205
    %v207 = vsel %vm136, %v206, %v202
    %v208 = vlaneseq
    %v209 = vshrl.u32 %v208, 7
    %v210 = vsub.s32 %v138, %v209
    %v211 = vrot.slane %v109, %v210
    %v212 = vsel %vm143, %v211, %v207
    %vm213 = vcmask 1043459
    %v214 = vsel %vm213, %v212, %v193
    %vm216 = vcmask 1041408
    %v217 = vsel %vm216, %v165, %v214
    %v218 = vld [vmem:[%s1] sm:$0xff]
    %v219 = vld [vmem:[%s1 + $0x8] sm:$0xff]
    %v220 = vld [vmem:[%s1 + $0x10] sm:$0xff]
    %v221 = vld [vmem:[%s1 + $0x18] sm:$0xff]
    %v222 = vld [vmem:[%s2] sm:$0x1]
    %v224 = vlaneseq
    %v225 = vshrl.u32 %v224, 7
    %v226 = vsub.s32 0, %v225
    %v227 = vrot.slane %v222, %v226
    %vm229 = vcmask 261120
    %v231 = vsel %vm229, %v217, 0
    %233 = vmatprep.subr.mxu0 0.0
    %234 = vmatpush1.msra.mxu0 %v218
    %235 = vmatprep.subr.mxu0 0.0
    %236 = vmatpush1.msra.mxu0 %v219
    %237 = vmatprep.subr.mxu0 0.0
    %238 = vmatpush1.msra.mxu0 %v220
    %239 = vmatprep.subr.mxu0 0.0
    %240 = vmatpush1.msra.mxu0 %v221
    %241 = vmatprep.subr.mxu0 0.0
    %242 = vmatpush1.msra.mxu0 0.0
    %243 = vmatprep.subr.mxu0 0.0
    %244 = vmatpush1.msra.mxu0 0.0
    %245 = vmatprep.subr.mxu0 0.0
    %246 = vmatpush1.msra.mxu0 0.0
    %247 = vmatprep.subr.mxu0 0.0
    %248 = vmatpush1.msra.mxu0 0.0
    %249 = vmatprep.subr.mxu0 0.0
    %250 = vmatpush1.msra.mxu0 0.0
    %251 = vmatprep.subr.mxu0 0.0
    %252 = vmatpush1.msra.mxu0 0.0
    %253 = vmatprep.subr.mxu0 0.0
    %254 = vmatpush1.msra.mxu0 0.0
    %255 = vmatprep.subr.mxu0 0.0
    %256 = vmatpush1.msra.mxu0 0.0
    %257 = vmatprep.subr.mxu0 0.0
    %258 = vmatpush1.msra.mxu0 0.0
    %259 = vmatprep.subr.mxu0 0.0
    %260 = vmatpush1.msra.mxu0 0.0
    %261 = vmatprep.subr.mxu0 0.0
    %262 = vmatpush1.msra.mxu0 0.0
    %263 = vmatprep.subr.mxu0 0.0
    %264 = vmatpush1.msra.mxu0 0.0
    %265 = vmatprep.subr.mxu0 0.0
    %266 = vmatpush1.msra.mxu0 0.0
    %267 = vmatprep.subr.mxu0 0.0
    %268 = vmatpush1.msra.mxu0 0.0
    %269 = vmatprep.subr.mxu0 0.0
    %270 = vmatpush1.msra.mxu0 0.0
    %271 = vmatprep.subr.mxu0 0.0
    %272 = vmatpush1.msra.mxu0 0.0
    %273 = vmatprep.subr.mxu0 0.0
    %274 = vmatpush1.msra.mxu0 0.0
    %275 = vmatprep.subr.mxu0 0.0
    %276 = vmatpush1.msra.mxu0 0.0
    %277 = vmatprep.subr.mxu0 0.0
    %278 = vmatpush1.msra.mxu0 0.0
    %279 = vmatprep.subr.mxu0 0.0
    %280 = vmatpush1.msra.mxu0 0.0
    %281 = vmatprep.subr.mxu0 0.0
    %282 = vmatpush1.msra.mxu0 0.0
    %283 = vmatprep.subr.mxu0 0.0
    %284 = vmatpush1.msra.mxu0 0.0
    %285 = vmatprep.subr.mxu0 0.0
    %286 = vmatpush1.msra.mxu0 0.0
    %287 = vmatprep.subr.mxu0 0.0
    %288 = vmatpush1.msra.mxu0 0.0
    %289 = vmatprep.subr.mxu0 0.0
    %290 = vmatpush1.msra.mxu0 0.0
    %291 = vmatprep.subr.mxu0 0.0
    %292 = vmatpush1.msra.mxu0 0.0
    %293 = vmatprep.subr.mxu0 0.0
    %294 = vmatpush1.msra.mxu0 0.0
    %295 = vmatprep.subr.mxu0 0.0
    %296 = vmatpush1.msra.mxu0 0.0
    %297 = vmatprep.mubr.f32.mxu0 0.0
    %298 = vmatmul.mubr.f32.gmra.mrb[0].mxu0 %v231
    %v299 = vpop.f32.mrb[0].mxu0
    %v300 = vadd.f32 %v227, %v299
    %v301 = vpop.f32.mrb[0].mxu0
    %302 = vdwg.mxu0
    %v303 = vmax.f32 %v300, 0.0
    %v304 = vld [vmem:[%s3] sm:$0x3]
    %v305 = vld [vmem:[%s4] sm:$0x1]
    %v307 = vlaneseq
    %v308 = vshrl.u32 %v307, 7
    %v309 = vsub.s32 0, %v308
    %v310 = vrot.slane %v305, %v309
    %vm312 = vcmask 15360
    %v314 = vsel %vm312, %v303, 0
    %v317 = vsel %vm216, %v304, 0
    %319 = vmatprep.subr.mxu0 0.0
    %320 = vmatpush1.msra.mxu0 %v317
    %321 = vmatprep.subr.mxu0 0.0
    %322 = vmatpush1.msra.mxu0 0.0
    %323 = vmatprep.subr.mxu0 0.0
    %324 = vmatpush1.msra.mxu0 0.0
    %325 = vmatprep.subr.mxu0 0.0
    %326 = vmatpush1.msra.mxu0 0.0
    %327 = vmatprep.subr.mxu0 0.0
    %328 = vmatpush1.msra.mxu0 0.0
    %329 = vmatprep.subr.mxu0 0.0
    %330 = vmatpush1.msra.mxu0 0.0
    %331 = vmatprep.subr.mxu0 0.0
    %332 = vmatpush1.msra.mxu0 0.0
    %333 = vmatprep.subr.mxu0 0.0
    %334 = vmatpush1.msra.mxu0 0.0
    %335 = vmatprep.subr.mxu0 0.0
    %336 = vmatpush1.msra.mxu0 0.0
    %337 = vmatprep.subr.mxu0 0.0
    %338 = vmatpush1.msra.mxu0 0.0
    %339 = vmatprep.subr.mxu0 0.0
    %340 = vmatpush1.msra.mxu0 0.0
    %341 = vmatprep.subr.mxu0 0.0
    %342 = vmatpush1.msra.mxu0 0.0
    %343 = vmatprep.subr.mxu0 0.0
    %344 = vmatpush1.msra.mxu0 0.0
    %345 = vmatprep.subr.mxu0 0.0
    %346 = vmatpush1.msra.mxu0 0.0
    %347 = vmatprep.subr.mxu0 0.0
    %348 = vmatpush1.msra.mxu0 0.0
    %349 = vmatprep.subr.mxu0 0.0
    %350 = vmatpush1.msra.mxu0 0.0
    %351 = vmatprep.subr.mxu0 0.0
    %352 = vmatpush1.msra.mxu0 0.0
    %353 = vmatprep.subr.mxu0 0.0
    %354 = vmatpush1.msra.mxu0 0.0
    %355 = vmatprep.subr.mxu0 0.0
    %356 = vmatpush1.msra.mxu0 0.0
    %357 = vmatprep.subr.mxu0 0.0
    %358 = vmatpush1.msra.mxu0 0.0
    %359 = vmatprep.subr.mxu0 0.0
    %360 = vmatpush1.msra.mxu0 0.0
    %361 = vmatprep.subr.mxu0 0.0
    %362 = vmatpush1.msra.mxu0 0.0
    %363 = vmatprep.subr.mxu0 0.0
    %364 = vmatpush1.msra.mxu0 0.0
    %365 = vmatprep.subr.mxu0 0.0
    %366 = vmatpush1.msra.mxu0 0.0
    %367 = vmatprep.subr.mxu0 0.0
    %368 = vmatpush1.msra.mxu0 0.0
    %369 = vmatprep.subr.mxu0 0.0
    %370 = vmatpush1.msra.mxu0 0.0
    %371 = vmatprep.subr.mxu0 0.0
    %372 = vmatpush1.msra.mxu0 0.0
    %373 = vmatprep.subr.mxu0 0.0
    %374 = vmatpush1.msra.mxu0 0.0
    %375 = vmatprep.subr.mxu0 0.0
    %376 = vmatpush1.msra.mxu0 0.0
    %377 = vmatprep.subr.mxu0 0.0
    %378 = vmatpush1.msra.mxu0 0.0
    %379 = vmatprep.subr.mxu0 0.0
    %380 = vmatpush1.msra.mxu0 0.0
    %381 = vmatprep.subr.mxu0 0.0
    %382 = vmatpush1.msra.mxu0 0.0
    %383 = vmatprep.mubr.f32.mxu0 0.0
    %384 = vmatmul.mubr.f32.gmra.mrb[0].mxu0 %v314
    %v385 = vpop.f32.mrb[0].mxu0
    %v386 = vadd.f32 %v310, %v385
    %v387 = vpop.f32.mrb[0].mxu0
    %388 = vdwg.mxu0
    %v390 = vrot.slane %v386, 2
    %v392 = vadd.f32 %v386, %v390
    %v393 = vxor.u32 %v392, 2147483648
    %v394 = vmul.f32 %v393, 1.442695
    %v395 = vpow.pop %v394
    %v396 = vadd.f32 %v395, 1.0
    %v397 = vrcp.pop %v396
    %v398 = vmul.f32 1.0, %v397
    %v399 = vlaneseq
    %v400 = vshrl.u32 %v399, 7
    %v401 = vsub.s32 0, %v400
    %v402 = vrot.slane %v398, %v401
    %404 = vbcast.lane.b32.xlu0 %v402, 256
    %v405 = vpop.permute.xlu0 %404
    %s407 = sor.u32 256, 8
    %408 = vbcast.lane.b32.xlu0 %v402, %s407
    %v409 = vpop.permute.xlu0 %408
    %s411 = sor.u32 256, 16
    %412 = vbcast.lane.b32.xlu0 %v402, %s411
    %v413 = vpop.permute.xlu0 %412
    %s415 = sor.u32 256, 24
    %416 = vbcast.lane.b32.xlu0 %v402, %s415
    %v417 = vpop.permute.xlu0 %416
    %v418 = vlaneseq
    %v419 = vshrl.u32 %v418, 7
    %v420 = vsub.s32 1, %v419
    %v421 = vrot.slane %v398, %v420
    %423 = vbcast.lane.b32.xlu0 %v421, 256
    %v424 = vpop.permute.xlu0 %423
    %s426 = sor.u32 256, 8
    %427 = vbcast.lane.b32.xlu0 %v421, %s426
    %v428 = vpop.permute.xlu0 %427
    %s430 = sor.u32 256, 16
    %431 = vbcast.lane.b32.xlu0 %v421, %s430
    %v432 = vpop.permute.xlu0 %431
    %s434 = sor.u32 256, 24
    %435 = vbcast.lane.b32.xlu0 %v421, %s434
    %v436 = vpop.permute.xlu0 %435
    %v437 = vmul.f32 %v38, %v405
    %v438 = vmul.f32 %v39, %v405
    %v439 = vmul.f32 %v40, %v409
    %v440 = vmul.f32 %v41, %v409
    %v441 = vmul.f32 %v42, %v413
    %v442 = vmul.f32 %v43, %v413
    %v443 = vmul.f32 %v44, %v417
    %v444 = vmul.f32 %v45, %v417
    %v445 = vmul.f32 %v46, %v424
    %v446 = vmul.f32 %v47, %v424
    %v447 = vmul.f32 %v48, %v428
    %v448 = vmul.f32 %v49, %v428
    %v449 = vmul.f32 %v50, %v432
    %v450 = vmul.f32 %v51, %v432
    %v451 = vmul.f32 %v52, %v436
    %v452 = vmul.f32 %v53, %v436
    %453 = vst [vmem:[#allocation5] sm:$0xff] %v437
    %454 = vst [vmem:[#allocation5 + $0x8] sm:$0xff] %v438
    %455 = vst [vmem:[#allocation5 + $0x10] sm:$0xff] %v439
    %456 = vst [vmem:[#allocation5 + $0x18] sm:$0xff] %v440
    %457 = vst [vmem:[#allocation5 + $0x20] sm:$0xff] %v441
    %458 = vst [vmem:[#allocation5 + $0x28] sm:$0xff] %v442
    %459 = vst [vmem:[#allocation5 + $0x30] sm:$0xff] %v443
    %460 = vst [vmem:[#allocation5 + $0x38] sm:$0xff] %v444
    %461 = vst [vmem:[#allocation5 + $0x40] sm:$0xff] %v445
    %462 = vst [vmem:[#allocation5 + $0x48] sm:$0xff] %v446
    %463 = vst [vmem:[#allocation5 + $0x50] sm:$0xff] %v447
    %464 = vst [vmem:[#allocation5 + $0x58] sm:$0xff] %v448
    %465 = vst [vmem:[#allocation5 + $0x60] sm:$0xff] %v449
    %466 = vst [vmem:[#allocation5 + $0x68] sm:$0xff] %v450
    %467 = vst [vmem:[#allocation5 + $0x70] sm:$0xff] %v451
    %468 = vst [vmem:[#allocation5 + $0x78] sm:$0xff] %v452
    %vm469 = vcmask 254976
    %470 = vst.msk [vmem:[#allocation6] sm:$0x3] %vm469, %v392
    // Predicated region
    $region26: #{tpu_custom_call.1} parent=1 // pred_check
      _
    $region27: #{tpu_custom_call.1} parent=1 // pred_check_branch
      %472 = sbr.rel (0) target = $region29
    $region28: #{tpu_custom_call.1} parent=1 // pred_region
      %s474 = ssub.s32 2048, 2048
      %475 = vsyncadd [#allocation4], %s474
      %s476 = sshll.u32 [#allocation5], 4
      %s477 = int_to_ptr.vmem [resolvable:$true] %s476
      %482 = dma.vmem_to_hbm [thread:$0]  %s477, 2048, %s5, [#allocation4], 256, 256, 16
    $region29: #{tpu_custom_call.1} parent=1 // pred_fallthru
      _
    // Predicated region
    $region30: #{tpu_custom_call.1} parent=1 // pred_check
      _
    $region31: #{tpu_custom_call.1} parent=1 // pred_check_branch
      %484 = sbr.rel (0) target = $region33
    $region32: #{tpu_custom_call.1} parent=1 // pred_region
      %s486 = ssub.s32 32, 32
      %487 = vsyncadd [#allocation7], %s486
      %s489 = sshll.u32 [#allocation6], 4
      %s490 = int_to_ptr.vmem [resolvable:$true] %s489
      %492 = dma.vmem_to_hbm [thread:$0]  %s490, 32, %s6, [#allocation7]
    $region33: #{tpu_custom_call.1} parent=1 // pred_fallthru
      _
    // Predicated region
    $region34: #{tpu_custom_call.1} parent=1 // pred_check
      _
    $region35: #{tpu_custom_call.1} parent=1 // pred_check_branch
      %494 = sbr.rel (0) target = $region37
    $region36: #{tpu_custom_call.1} parent=1 // pred_region
      %495 = dma.done [#allocation4], 2048
    $region37: #{tpu_custom_call.1} parent=1 // pred_fallthru
      _
    // Predicated region
    $region38: #{tpu_custom_call.1} parent=1 // pred_check
      _
    $region39: #{tpu_custom_call.1} parent=1 // pred_check_branch
      %497 = sbr.rel (0) target = $region41
    $region40: #{tpu_custom_call.1} parent=1 // pred_region
      %498 = dma.done [#allocation7], 32
    $region41: #{tpu_custom_call.1} parent=1 // pred_fallthru
      _
    %499 = vsyncpa [#allocation3], 1
    %500 = vsyncpa [#allocation4], 1
    %501 = vsyncpa [#allocation7], 1

</llo_original>
